<compile_context>
chip_gen: v6e
topology: v6e:2x2x1
jax: 0.10.0
libtpu: 0.0.40
codegen_flags: <defaults>
</compile_context>

<pallas_src>
import functools
import math

import jax
import jax.numpy as jnp
from jax import lax
from jax.experimental import pallas as pl
from jax.experimental.pallas import tpu as pltpu

EPS = 1e-9


def _matern_tile_kernel(a_ref, bT_ref, sv_ref, o_ref, *, nu, rho):
    # Single MXU contraction of the augmented operands gives the squared
    # pairwise distances: ||a||^2 + ||b||^2 - 2 a.b  (clamped for cancellation).
    sqdist = lax.dot_general(
        a_ref[...], bT_ref[...],
        dimension_numbers=(((1,), (0,)), ((), ())),
        preferred_element_type=jnp.float32,
    )
    sqdist = jnp.maximum(sqdist, 0.0)

    sv = sv_ref[0]  # |signal_variance|, abs() folded in the wrapper (SMEM scalar)

    if nu == 0.5:
        d = jnp.sqrt(sqdist) * (1.0 / rho)
        out = sv * jnp.exp(-d)
    elif nu == 1.5:
        d = jnp.sqrt(sqdist) * (math.sqrt(3.0) / rho)
        out = sv * (1.0 + d) * jnp.exp(-d)
    else:  # nu == 2.5 (validated in the wrapper)
        c1 = math.sqrt(5.0) / rho
        c2 = 5.0 / (3.0 * rho * rho)
        d = jnp.sqrt(sqdist) * c1
        out = sv * (1.0 + d + sqdist * c2) * jnp.exp(-d)

    o_ref[...] = out.astype(o_ref.dtype)


def _round_up(x, m):
    return ((x + m - 1) // m) * m


def _choose_tile(n, align, max_tile, min_tiles=1):
    """Pick a tile (multiple of `align`, <= max_tile) and the padded extent.

    When `min_tiles` > 1 and the array is large enough, the tile is shrunk so
    the grid has at least `min_tiles` steps along this axis (v7x dual-core).
    """
    n_aligned = _round_up(n, align)
    cap = min(max_tile, n_aligned)
    if min_tiles > 1 and n_aligned >= min_tiles * align:
        cap = min(cap, _round_up(-(-n_aligned // min_tiles), align))
    num_tiles = -(-n_aligned // cap)
    tile = _round_up(-(-n_aligned // num_tiles), align)
    return tile, tile * num_tiles


def matern_forward(x1, x2, length_scales, signal_variance, *, nu=2.5, rho=1.0,
                   eps=EPS, max_tm=512, max_tn=2048, out_dtype=jnp.float32):
    """Matern covariance matrix K(x1, x2) via a tiled Pallas TPU kernel."""
    if nu not in (0.5, 1.5, 2.5):
        # TODO(synk): general-nu Matern needs the modified Bessel function K_nu; no Pallas equivalent.
        raise NotImplementedError(f"nu={nu} is not supported (use 0.5, 1.5 or 2.5)")

    n1, d = x1.shape
    n2, d2 = x2.shape
    assert d == d2 == length_scales.shape[0]

    f32 = jnp.float32
    inv_ls = 1.0 / (jnp.abs(length_scales.astype(f32)) + eps)      # (D,)
    a = x1.astype(f32) * inv_ls                                    # (N1, D) scaled
    b = x2.astype(f32) * inv_ls                                    # (N2, D) scaled
    a2 = jnp.sum(a * a, axis=-1, keepdims=True)                    # (N1, 1)
    b2 = jnp.sum(b * b, axis=-1, keepdims=True)                    # (N2, 1)
    sv = jnp.abs(jnp.reshape(signal_variance, (1,)).astype(f32))   # |sigma^2|, SMEM

    # Row tiles: sublane-aligned, >= 2 grid steps when possible (v7x 2 TCs).
    # Column tiles: lane-dense multiples of 128, large for store amortization.
    tm, n1p = _choose_tile(n1, 8, max_tm, min_tiles=2)
    tn, n2p = _choose_tile(n2, 128, max_tn)
    dp = max(_round_up(d + 2, 8), 8)  # augmented K = D + 2, sublane-aligned

    # Augmented operands: A_aug = [a, ||a||^2, 1], B_aug^T = [-2 b^T ; 1 ; ||b||^2],
    # so A_aug @ B_aug^T = ||a||^2 + ||b||^2 - 2 a.b. Zero padding keeps padded
    # rows/cols at sqdist == 0 (sliced off afterwards anyway).
    a_aug = jnp.concatenate([a, a2, jnp.ones((n1, 1), f32)], axis=1)      # (N1, D+2)
    a_aug = jnp.pad(a_aug, ((0, n1p - n1), (0, dp - (d + 2))))            # (N1p, dp)

    b_aug_t = jnp.concatenate([-2.0 * b, jnp.ones((n2, 1), f32), b2], axis=1).T  # (D+2, N2)
    b_aug_t = jnp.pad(b_aug_t, ((0, dp - (d + 2)), (0, n2p - n2)))               # (dp, N2p)

    kernel = functools.partial(_matern_tile_kernel, nu=nu, rho=float(rho))

    out = pl.pallas_call(
        kernel,
        out_shape=jax.ShapeDtypeStruct((n1p, n2p), out_dtype),
        grid=(n1p // tm, n2p // tn),
        in_specs=[
            pl.BlockSpec((tm, dp), lambda i, j: (i, 0)),
            pl.BlockSpec((dp, tn), lambda i, j: (0, j)),
            pl.BlockSpec(memory_space=pltpu.MemorySpace.SMEM),
        ],
        out_specs=pl.BlockSpec((tm, tn), lambda i, j: (i, j)),
        compiler_params=pltpu.CompilerParams(
            dimension_semantics=("parallel", "parallel"),
            vmem_limit_bytes=48 * 1024 * 1024,
        ),
    )(a_aug, b_aug_t, sv)

    return out[:n1, :n2]


def matern_reference(x1, x2, length_scales, signal_variance, *, nu=2.5, rho=1.0, eps=EPS):
    ls = jnp.abs(length_scales) + eps
    a = x1 / ls
    b = x2 / ls
    sqdist = jnp.maximum(
        jnp.sum(a * a, -1)[:, None] + jnp.sum(b * b, -1)[None, :] - 2.0 * (a @ b.T), 0.0
    )
    sv = jnp.abs(signal_variance[0])
    if nu == 0.5:
        return sv * jnp.exp(-jnp.sqrt(sqdist) / rho)
    if nu == 1.5:
        dd = jnp.sqrt(3.0 * sqdist) / rho
        return sv * (1.0 + dd) * jnp.exp(-dd)
    if nu == 2.5:
        dd = jnp.sqrt(5.0 * sqdist) / rho
        return sv * (1.0 + dd + 5.0 / 3.0 * sqdist / rho ** 2) * jnp.exp(-dd)
    raise NotImplementedError


if __name__ == "__main__":
    key = jax.random.PRNGKey(0)
    k1, k2, k3, k4, k5 = jax.random.split(key, 5)

    # --- Case 1: module defaults at small shapes (matches nn.Module __init__). ---
    input_dim = 4
    n1, n2 = 16, 8
    length_scales = jnp.ones((input_dim,), jnp.float32)   # initial_length_scale = 1.0
    signal_variance = jnp.array([1.0], jnp.float32)       # initial_signal_variance = 1.0
    x1 = jax.random.normal(k1, (n1, input_dim), jnp.float32)
    x2 = jax.random.normal(k2, (n2, input_dim), jnp.float32)

    out = jax.block_until_ready(
        matern_forward(x1, x2, length_scales, signal_variance, nu=2.5, rho=1.0))
    ref = matern_reference(x1, x2, length_scales, signal_variance, nu=2.5, rho=1.0)
    assert out.shape == (n1, n2)
    assert jnp.allclose(out, ref, atol=1e-4, rtol=1e-4), "mismatch vs reference (case 1)"

    # --- Case 2: non-trivial params + shapes exercising tiling, padding, >=2 row tiles. ---
    n1b, n2b, db = 300, 200, 7
    ls_b = jax.random.uniform(k3, (db,), jnp.float32, 0.5, 2.0)
    sv_b = jnp.array([1.7], jnp.float32)
    x1b = jax.random.normal(k4, (n1b, db), jnp.float32)
    x2b = jax.random.normal(k5, (n2b, db), jnp.float32)
    for nu_val in (0.5, 1.5, 2.5):
        outb = jax.block_until_ready(
            matern_forward(x1b, x2b, ls_b, sv_b, nu=nu_val, rho=1.3))
        refb = matern_reference(x1b, x2b, ls_b, sv_b, nu=nu_val, rho=1.3)
        assert outb.shape == (n1b, n2b)
        assert jnp.allclose(outb, refb, atol=1e-4, rtol=1e-4), f"mismatch (nu={nu_val})"

    # --- Case 3: bf16 output mode (store-bound v5e/v6e option), loose tolerance. ---
    out_bf16 = jax.block_until_ready(
        matern_forward(x1b, x2b, ls_b, sv_b, nu=2.5, rho=1.3, out_dtype=jnp.bfloat16))
    ref_b = matern_reference(x1b, x2b, ls_b, sv_b, nu=2.5, rho=1.3)
    assert out_bf16.shape == (n1b, n2b)
    assert jnp.allclose(out_bf16.astype(jnp.float32), ref_b, atol=2e-2, rtol=2e-2), \
        "mismatch vs reference (bf16 output mode)"

    print("KERNEL_OK")
</pallas_src>

<mosaic_0001>
module attributes {stable_mosaic.version = 11 : i64} {
  func.func @_matern_tile_kernel(%arg0: i32, %arg1: i32, %arg2: memref<8x8xf32, #tpu.memory_space<vmem>>, %arg3: memref<8x128xf32, #tpu.memory_space<vmem>>, %arg4: memref<1xf32, #tpu.memory_space<smem>>, %arg5: memref<8x128xf32, #tpu.memory_space<vmem>>) attributes {dimension_semantics = [#tpu.dimension_semantics<parallel>, #tpu.dimension_semantics<parallel>], iteration_bounds = array<i64: 2, 1>, scalar_prefetch = 0 : i64, scratch_operands = 0 : i64, tpu.core_type = #tpu.core_type<tc>, window_params = [{transform_indices = @transform_0, window_bounds = array<i64: 8, 8>}, {transform_indices = @transform_1, window_bounds = array<i64: 8, 128>}, {transform_indices = @transform_2, window_bounds = array<i64: 1>}, {transform_indices = @transform_3, window_bounds = array<i64: 8, 128>}]} {
    %c0 = arith.constant 0 : index
    %c0_0 = arith.constant 0 : index
    %0 = vector.load %arg2[%c0, %c0_0] : memref<8x8xf32, #tpu.memory_space<vmem>>, vector<8x8xf32>
    %c0_1 = arith.constant 0 : index
    %c0_2 = arith.constant 0 : index
    %1 = vector.load %arg3[%c0_1, %c0_2] : memref<8x128xf32, #tpu.memory_space<vmem>>, vector<8x128xf32>
    %cst = arith.constant dense<0.000000e+00> : vector<8x128xf32>
    %2 = tpu.matmul %0, %1, %cst {dimension_numbers = #tpu.dot_dimension_numbers<[1], [0], [0], [1], [0, 0, 1, 1], [], []>} : vector<8x8xf32>, vector<8x128xf32>, vector<8x128xf32> -> vector<8x128xf32>
    %cst_3 = arith.constant 0.000000e+00 : f32
    %3 = vector.broadcast %cst_3 : f32 to vector<8x128xf32>
    %4 = arith.maximumf %2, %3 : vector<8x128xf32>
    %c0_4 = arith.constant 0 : index
    %5 = memref.load %arg4[%c0_4] : memref<1xf32, #tpu.memory_space<smem>>
    %6 = math.sqrt %4 : vector<8x128xf32>
    %cst_5 = arith.constant 2.23606801 : f32
    %7 = vector.broadcast %cst_5 : f32 to vector<8x128xf32>
    %8 = arith.mulf %6, %7 : vector<8x128xf32>
    %cst_6 = arith.constant 1.000000e+00 : f32
    %9 = vector.broadcast %cst_6 : f32 to vector<8x128xf32>
    %10 = arith.addf %9, %8 : vector<8x128xf32>
    %cst_7 = arith.constant 1.66666663 : f32
    %11 = vector.broadcast %cst_7 : f32 to vector<8x128xf32>
    %12 = arith.mulf %4, %11 : vector<8x128xf32>
    %13 = arith.addf %10, %12 : vector<8x128xf32>
    %14 = vector.broadcast %5 : f32 to vector<8x128xf32>
    %15 = arith.mulf %14, %13 : vector<8x128xf32>
    %cst_8 = arith.constant 0.000000e+00 : f32
    %16 = vector.broadcast %cst_8 : f32 to vector<8x128xf32>
    %17 = arith.subf %16, %8 : vector<8x128xf32>
    %18 = math.exp %17 : vector<8x128xf32>
    %19 = arith.mulf %15, %18 : vector<8x128xf32>
    %c0_9 = arith.constant 0 : index
    %c0_10 = arith.constant 0 : index
    %20 = vector.load %arg5[%c0_9, %c0_10] : memref<8x128xf32, #tpu.memory_space<vmem>>, vector<8x128xf32>
    tpu.vector_store %arg5[%c0_9, %c0_10], %19 {strides = array<i32>} : memref<8x128xf32, #tpu.memory_space<vmem>>, vector<8x128xf32>,
    return
  }
  func.func @transform_0(%arg0: i32, %arg1: i32) -> (i32, i32) {
    %c0_i32 = arith.constant 0 : i32
    %c0_i32_0 = arith.constant 0 : i32
    return %arg0, %c0_i32 : i32, i32
  }
  func.func @transform_1(%arg0: i32, %arg1: i32) -> (i32, i32) {
    %c0_i32 = arith.constant 0 : i32
    %c0_i32_0 = arith.constant 0 : i32
    return %c0_i32, %arg1 : i32, i32
  }
  func.func @transform_2(%arg0: i32, %arg1: i32) -> i32 {
    %c0_i32 = arith.constant 0 : i32
    %c0_i32_0 = arith.constant 0 : i32
    return %c0_i32 : i32
  }
  func.func @transform_3(%arg0: i32, %arg1: i32) -> (i32, i32) {
    %c0_i32 = arith.constant 0 : i32
    return %arg0, %arg1 : i32, i32
  }
}

</mosaic_0001>

<llo_original>
// kernel: tpu_custom_call.1
$region0: #{tpu_custom_call.1}
  #allocation0 [shape = 'u32[]', space=smem, size = 0x4, offset = 0x4, fixed_abs, tag = 'smem constant byte address 0x4 - core index']
  #allocation1 [shape = 'u32[144,128]{1,0:T(1,128)}', space=vmem, size = 0x12000, scoped, tag = 'internal scratch']
  #allocation2 [shape = 'f32[1]{0:T(128)S(6)}', space=smem, size = 0x200, scoped, tag = 'scoped memory for tpu_custom_call.1']
  %s0 = inlined_call_operand.vmem [shape: f32[16,8], index: 0, kind: input, shape index: {}]
  %s1 = inlined_call_operand.vmem [shape: f32[8,128], index: 1, kind: input, shape index: {}]
  %s2 = inlined_call_operand.<no memory space> [shape: f32[1], index: 2, kind: input, shape index: {}]
  %s3 = inlined_call_operand.hbm [shape: f32[16,128], index: 3, kind: output, shape index: {}]
  %s4 = sld [smem:[#allocation0]]
  $region45: #{tpu_custom_call.1} parent=0
    _
  %s6 = ssub.s32 1, %s4
  %s7 = scalar_select 0, %s6, %s4
  %8 = sst [smem:[#allocation2]] %s2
  $region1: #{tpu_custom_call.1} parent=0
    #allocation3 [shape = 'u8[8192]{0}', space=vmem, size = 0x2000, scoped, tag = 'output window, operand 0']
    #allocation4 [shape = 's32[2]{0}', space=sflag, size = 0x8, scoped, tag = 'scoped memory for tpu_custom_call.1']
    %9 = vsyncpa [#allocation4], 0
    %s10 = scalar_lea.sflag [#allocation4], 1
    %11 = vsyncpa %s10, 0
    loop: start=0, step=1, limit=4
    $region2: #{tpu_custom_call.1} parent=1 // loop_pre_header
      _
    $region3: #{tpu_custom_call.1} parent=1 // loop_header
      %s13 = sphi 0, %s17
      %p14 = scmp.ge.s32.totalorder %s13, 4
      %s20 = sphi 0, %s32
      %s21 = sphi 0, %s28
      %s22 = sphi 0, %s20
      %s23 = sphi 0, %s21
      %s24 = sphi 0, %s22
      %s25 = sphi 0, %s23
      %s35 = sphi 0, %s37
      %s38 = sphi 0, %s35
      %s39 = sphi 0, %s38
      %s55 = sphi 0, %s39
      %s61 = sphi 0, %s63
      %s64 = sphi 0, %s61
      %s65 = sphi 0, %s64
      %s81 = sphi 0, %s65
      %s85 = sphi 0, %s85
      %s87 = sphi 0, %s85
      %s88 = sphi 0, %s87
      %s102 = sphi 0, %s88
      %s110 = sphi 0, %s112
      %s113 = sphi 0, %s110
      %s114 = sphi 0, %s113
      %s130 = sphi 0, %s114
    $region4: #{tpu_custom_call.1} parent=1 // loop_header_branch
      %16 = sbr.rel (%p14) target = $region8
    $region5: #{tpu_custom_call.1} parent=1 // loop_body
      %s18 = ssub.s32 %s13, 1
      %s19 = ssub.s32 %s13, 2
      %s26 = sadd.s32 1, %s21
      %p27 = scmp.ge.s32.totalorder %s26, 1
      %s28 = scalar_select %p27, 0, %s26
      %s29 = sadd.s32 1, %s20
      %s30 = scalar_select %p27, %s29, %s20
      %p31 = scmp.ge.s32.totalorder %s30, 2
      %s32 = scalar_select %p31, 0, %s30
      %s33 = ssub.s32 %s20, %s32
      %p34 = scmp.eq.s32.totalorder %s33, 0
      %s36 = sadd.s32 %s35, 1
      %s37 = scalar_select %p34, %s35, %s36
      %p40 = pneg %p34
      %p41 = scmp.eq.s32.totalorder %s13, 1
      %p42 = por %p40, %p41
      %p43 = scmp.ne.s32.totalorder %s35, %s38
      %p44 = scmp.eq.s32.totalorder %s13, 0
      %p45 = por %p43, %p44
      %p46 = scmp.ne.s32.totalorder %s35, %s38
      %p47 = scmp.eq.s32.totalorder %s18, 1
      %p48 = por %p46, %p47
      %p49 = scmp.ne.s32.totalorder %s38, %s39
      %p50 = scmp.eq.s32.totalorder %s18, 0
      %p51 = por %p49, %p50
      %p52 = scmp.ne.s32.totalorder %s38, %s39
      %p53 = scmp.eq.s32.totalorder %s19, 1
      %p54 = por %p52, %p53
      %p56 = scmp.ne.s32.totalorder %s39, %s55
      %p57 = scmp.eq.s32.totalorder %s19, 0
      %p58 = por %p56, %p57
      %s59 = ssub.s32 %s21, %s28
      %p60 = scmp.eq.s32.totalorder %s59, 0
      %s62 = sadd.s32 %s61, 1
      %s63 = scalar_select %p60, %s61, %s62
      %p66 = pneg %p60
      %p67 = scmp.eq.s32.totalorder %s13, 1
      %p68 = por %p66, %p67
      %p69 = scmp.ne.s32.totalorder %s61, %s64
      %p70 = scmp.eq.s32.totalorder %s13, 0
      %p71 = por %p69, %p70
      %p72 = scmp.ne.s32.totalorder %s61, %s64
      %p73 = scmp.eq.s32.totalorder %s18, 1
      %p74 = por %p72, %p73
      %p75 = scmp.ne.s32.totalorder %s64, %s65
      %p76 = scmp.eq.s32.totalorder %s18, 0
      %p77 = por %p75, %p76
      %p78 = scmp.ne.s32.totalorder %s64, %s65
      %p79 = scmp.eq.s32.totalorder %s19, 1
      %p80 = por %p78, %p79
      %p82 = scmp.ne.s32.totalorder %s65, %s81
      %p83 = scmp.eq.s32.totalorder %s19, 0
      %p84 = por %p82, %p83
      %s86 = sadd.s32 %s85, 1
      %p89 = scmp.eq.s32.totalorder %s13, 1
      %p90 = scmp.ne.s32.totalorder %s85, %s87
      %p91 = scmp.eq.s32.totalorder %s13, 0
      %p92 = por %p90, %p91
      %p93 = scmp.ne.s32.totalorder %s85, %s87
      %p94 = scmp.eq.s32.totalorder %s18, 1
      %p95 = por %p93, %p94
      %p96 = scmp.ne.s32.totalorder %s87, %s88
      %p97 = scmp.eq.s32.totalorder %s18, 0
      %p98 = por %p96, %p97
      %p99 = scmp.ne.s32.totalorder %s87, %s88
      %p100 = scmp.eq.s32.totalorder %s19, 1
      %p101 = por %p99, %p100
      %p103 = scmp.ne.s32.totalorder %s88, %s102
      %p104 = scmp.eq.s32.totalorder %s19, 0
      %p105 = por %p103, %p104
      %s106 = ssub.s32 %s20, %s32
      %s107 = ssub.s32 %s21, %s28
      %s108 = sor.u32 %s106, %s107
      %p109 = scmp.eq.s32.totalorder %s108, 0
      %s111 = sadd.s32 %s110, 1
      %s112 = scalar_select %p109, %s110, %s111
      %p115 = pneg %p109
      %p116 = scmp.eq.s32.totalorder %s13, 1
      %p117 = por %p115, %p116
      %p118 = scmp.ne.s32.totalorder %s110, %s113
      %p119 = scmp.eq.s32.totalorder %s13, 0
      %p120 = por %p118, %p119
      %p121 = scmp.ne.s32.totalorder %s110, %s113
      %p122 = scmp.eq.s32.totalorder %s18, 1
      %p123 = por %p121, %p122
      %p124 = scmp.ne.s32.totalorder %s113, %s114
      %p125 = scmp.eq.s32.totalorder %s18, 0
      %p126 = por %p124, %p125
      %p127 = scmp.ne.s32.totalorder %s113, %s114
      %p128 = scmp.eq.s32.totalorder %s19, 1
      %p129 = por %p127, %p128
      %p131 = scmp.ne.s32.totalorder %s114, %s130
      %p132 = scmp.eq.s32.totalorder %s19, 0
      %p133 = por %p131, %p132
      %p134 = scmp.le.s32.totalorder 1, %s13
      %p135 = scmp.lt.s32.totalorder %s13, 3
      %p136 = pnand %p134, %p135
      %p137 = pneg %p136
      // Predicated region
      $region9: #{tpu_custom_call.1} parent=5 // pred_check
        _
      $region10: #{tpu_custom_call.1} parent=5 // pred_check_branch
        %139 = sbr.rel (%p136) target = $region12
      $region11: #{tpu_custom_call.1} parent=5 // pred_region
        %s140 = ssub.s32 %s13, 1
        // Predicated region
        $region13: #{tpu_custom_call.1} parent=11 // pred_check
          %p141 = pneg %p77
        $region14: #{tpu_custom_call.1} parent=11 // pred_check_branch
          %143 = sbr.rel (%p141) target = $region16
        $region15: #{tpu_custom_call.1} parent=11 // pred_region
          %p144 = scmp.lt.s32.totalorder %s23, 0
          %s145 = scalar_select %p144, %s23, 0
          %s146 = smul.addr %s145, 8
          %s147 = scalar_lea.vmem %s1, %s146
        $region16: #{tpu_custom_call.1} parent=11 // pred_fallthru
          _
        // Predicated region
        $region17: #{tpu_custom_call.1} parent=11 // pred_check
          %p148 = pneg %p98
        $region18: #{tpu_custom_call.1} parent=11 // pred_check_branch
          %150 = sbr.rel (%p148) target = $region20
        $region19: #{tpu_custom_call.1} parent=11 // pred_region
          _
        $region20: #{tpu_custom_call.1} parent=11 // pred_fallthru
          _
      $region12: #{tpu_custom_call.1} parent=5 // pred_fallthru
        _
      %p151 = scmp.lt.s32.totalorder %s13, 2
      // Predicated region
      $region21: #{tpu_custom_call.1} parent=5 // pred_check
        %p152 = pneg %p151
      $region22: #{tpu_custom_call.1} parent=5 // pred_check_branch
        %154 = sbr.rel (%p152) target = $region24
      $region23: #{tpu_custom_call.1} parent=5 // pred_region
        // Predicated region
        $region25: #{tpu_custom_call.1} parent=23 // pred_check
          %p155 = pneg %p45
        $region26: #{tpu_custom_call.1} parent=23 // pred_check_branch
          %157 = sbr.rel (%p155) target = $region28
        $region27: #{tpu_custom_call.1} parent=23 // pred_region
          %p158 = scmp.lt.s32.totalorder %s20, 1
          %s159 = scalar_select %p158, %s20, 1
          %s160 = smul.addr %s159, 8
          %s161 = scalar_lea.vmem %s0, %s160
        $region28: #{tpu_custom_call.1} parent=23 // pred_fallthru
          _
      $region24: #{tpu_custom_call.1} parent=5 // pred_fallthru
        _
      %p162 = scmp.le.s32.totalorder 1, %s13
      %p163 = scmp.lt.s32.totalorder %s13, 3
      %p164 = pnand %p162, %p163
      %p165 = pneg %p164
      // Predicated region
      $region29: #{tpu_custom_call.1} parent=5 // pred_check
        _
      $region30: #{tpu_custom_call.1} parent=5 // pred_check_branch
        %167 = sbr.rel (%p164) target = $region32
      $region31: #{tpu_custom_call.1} parent=5 // pred_region
        %s168 = ssub.s32 %s13, 1
        %p169 = scmp.lt.s32.totalorder %s22, 1
        %s170 = scalar_select %p169, %s22, 1
        %s171 = smul.addr %s170, 8
        %s172 = scalar_lea.vmem %s0, %s171
        %p173 = pneg %p51
        %p174 = pneg %p48
        %p175 = scmp.lt.s32.totalorder %s23, 0
        %s176 = scalar_select %p175, %s23, 0
        %s177 = smul.addr %s176, 8
        %s178 = scalar_lea.vmem %s1, %s177
        %p179 = pneg %p77
        %p180 = pneg %p74
        %p181 = pneg %p98
        %p182 = pneg %p95
        %p183 = pneg %p126
        %p184 = pneg %p123
        %s185 = sand.u32 %s113, 1
        %s186 = scalar_lea.sflag [#allocation4], %s185
        %s187 = sand.u32 %s113, 1
        %s188 = smul.addr %s187, 8
        %s189 = scalar_lea.vmem [#allocation3], %s188
        %p190 = scmp.lt.s32.totalorder %s22, 1
        %s191 = scalar_select %p190, %s22, 1
        %s192 = smul.addr %s191, 8
        %s193 = scalar_lea.vmem %s0, %s192
        %p194 = scmp.lt.s32.totalorder %s23, 0
        %s195 = scalar_select %p194, %s23, 0
        %s196 = smul.addr %s195, 8
        %s197 = scalar_lea.vmem %s1, %s196
        %v198 = vld [vmem:[%s193] sm:$0xff]
        %v199 = vld [vmem:[%s197] sm:$0xff]
        %vm200 = vcmask 64512
        %v202 = vsel %vm200, %v198, 0
        %204 = vmatprep.subr.mxu0 0.0
        %205 = vmatpush1.msra.mxu0 0.0
        %206 = vmatprep.subr.mxu0 0.0
        %207 = vmatpush1.msra.mxu0 0.0
        %208 = vmatprep.subr.mxu0 0.0
        %209 = vmatpush1.msra.mxu0 0.0
        %210 = vmatprep.subr.mxu0 0.0
        %211 = vmatpush1.msra.mxu0 0.0
        %212 = vmatprep.subr.mxu0 0.0
        %213 = vmatpush1.msra.mxu0 0.0
        %214 = vmatprep.subr.mxu0 0.0
        %215 = vmatpush1.msra.mxu0 0.0
        %216 = vmatprep.subr.mxu0 0.0
        %217 = vmatpush1.msra.mxu0 0.0
        %218 = vmatprep.subr.mxu0 0.0
        %219 = vmatpush1.msra.mxu0 0.0
        %220 = vmatprep.subr.mxu0 0.0
        %221 = vmatpush1.msra.mxu0 0.0
        %222 = vmatprep.subr.mxu0 0.0
        %223 = vmatpush1.msra.mxu0 0.0
        %224 = vmatprep.subr.mxu0 0.0
        %225 = vmatpush1.msra.mxu0 0.0
        %226 = vmatprep.subr.mxu0 0.0
        %227 = vmatpush1.msra.mxu0 0.0
        %228 = vmatprep.subr.mxu0 0.0
        %229 = vmatpush1.msra.mxu0 0.0
        %230 = vmatprep.subr.mxu0 0.0
        %231 = vmatpush1.msra.mxu0 0.0
        %232 = vmatprep.subr.mxu0 0.0
        %233 = vmatpush1.msra.mxu0 0.0
        %234 = vmatprep.subr.mxu0 0.0
        %235 = vmatpush1.msra.mxu0 %v199
        %236 = vmatprep.subr.mxu0 0.0
        %237 = vmatpush2.msra.mxu0 0.0
        %238 = vmatprep.subr.mxu0 0.0
        %239 = vmatpush2.msra.mxu0 0.0
        %240 = vmatprep.subr.mxu0 0.0
        %241 = vmatpush2.msra.mxu0 0.0
        %242 = vmatprep.subr.mxu0 0.0
        %243 = vmatpush2.msra.mxu0 0.0
        %244 = vmatprep.subr.mxu0 0.0
        %245 = vmatpush2.msra.mxu0 0.0
        %246 = vmatprep.subr.mxu0 0.0
        %247 = vmatpush2.msra.mxu0 0.0
        %248 = vmatprep.subr.mxu0 0.0
        %249 = vmatpush2.msra.mxu0 0.0
        %250 = vmatprep.subr.mxu0 0.0
        %251 = vmatpush2.msra.mxu0 0.0
        %252 = vmatprep.subr.mxu0 0.0
        %253 = vmatpush2.msra.mxu0 0.0
        %254 = vmatprep.subr.mxu0 0.0
        %255 = vmatpush2.msra.mxu0 0.0
        %256 = vmatprep.subr.mxu0 0.0
        %257 = vmatpush2.msra.mxu0 0.0
        %258 = vmatprep.subr.mxu0 0.0
        %259 = vmatpush2.msra.mxu0 0.0
        %260 = vmatprep.subr.mxu0 0.0
        %261 = vmatpush2.msra.mxu0 0.0
        %262 = vmatprep.subr.mxu0 0.0
        %263 = vmatpush2.msra.mxu0 0.0
        %264 = vmatprep.subr.mxu0 0.0
        %265 = vmatpush2.msra.mxu0 0.0
        %266 = vmatprep.subr.mxu0 0.0
        %267 = vmatpush2.msra.mxu0 0.0
        %268 = vmatprep.mubr.f32.mxu0 0.0
        %269 = vmatmul.mubr.f32.gmra.mxu0 %v202
        %v270 = vpop.f32.mrf.mxu0
        %v271 = vadd.f32 0.0, %v270
        %v272 = vpop.f32.mrf.mxu0
        %273 = vdwg.mxu0
        %v274 = vmax.f32 %v271, 0.0
        %s275 = sld [smem:[#allocation2]]
        %v276 = vrsqrt.pop %v274
        %v277 = vmul.f32 %v274, %v276
        %vm278 = vcmp.eq.f32.partialorder %v274, inf
        %v279 = vsel %vm278, %v274, %v277
        %vm280 = vcmp.eq.f32.partialorder %v274, 0.0
        %v281 = vand.u32 %v274, 2147483648
        %v282 = vsel %vm280, %v281, %v279
        %v283 = vmul.f32 %v282, 2.236068
        %v284 = vadd.f32 %v283, 1.0
        %v285 = vmul.f32 %v274, 1.6666666
        %v286 = vadd.f32 %v284, %v285
        %v287 = vstv %s275
        %v288 = vmul.f32 %v287, %v286
        %v289 = vsub.f32 0.0, %v283
        %v290 = vmul.f32 %v289, 1.442695
        %v291 = vpow.pop %v290
        %v292 = vmul.f32 %v288, %v291
        %293 = vst [vmem:[%s189] sm:$0xff] %v292
        %s294 = sand.u32 %s113, 1
        %s295 = scalar_lea.sflag [#allocation4], %s294
        %s296 = sand.u32 %s113, 1
        %s297 = smul.addr %s296, 8
        %s298 = scalar_lea.vmem [#allocation3], %s297
        // Predicated region
        $region33: #{tpu_custom_call.1} parent=31 // pred_check
          %p299 = pneg %p123
        $region34: #{tpu_custom_call.1} parent=31 // pred_check_branch
          %301 = sbr.rel (%p299) target = $region36
        $region35: #{tpu_custom_call.1} parent=31 // pred_region
          %s303 = ssub.s32 128, 128
          %304 = vsyncadd %s295, %s303
          %s305 = sadd.s32 %s23, %s22
          %s306 = smul.addr %s305, 128
          %s307 = scalar_lea.hbm %s3, %s306
          %s309 = sshll.u32 %s298, 4
          %s310 = int_to_ptr.vmem [resolvable:$true] %s309
          %312 = dma.vmem_to_hbm [thread:$0]  %s310, 128, %s307, %s295
        $region36: #{tpu_custom_call.1} parent=31 // pred_fallthru
          _
      $region32: #{tpu_custom_call.1} parent=5 // pred_fallthru
        _
      %p313 = scmp.le.s32.totalorder 2, %s13
      // Predicated region
      $region37: #{tpu_custom_call.1} parent=5 // pred_check
        %p314 = pneg %p313
      $region38: #{tpu_custom_call.1} parent=5 // pred_check_branch
        %316 = sbr.rel (%p314) target = $region40
      $region39: #{tpu_custom_call.1} parent=5 // pred_region
        %s317 = ssub.s32 %s13, 2
        // Predicated region
        $region41: #{tpu_custom_call.1} parent=39 // pred_check
          %p318 = pneg %p129
        $region42: #{tpu_custom_call.1} parent=39 // pred_check_branch
          %320 = sbr.rel (%p318) target = $region44
        $region43: #{tpu_custom_call.1} parent=39 // pred_region
          %s321 = sand.u32 %s114, 1
          %s322 = scalar_lea.sflag [#allocation4], %s321
          %s323 = sand.u32 %s114, 1
          %s324 = smul.addr %s323, 8
          %s325 = scalar_lea.vmem [#allocation3], %s324
          %326 = dma.done %s322, 128
        $region44: #{tpu_custom_call.1} parent=39 // pred_fallthru
          _
      $region40: #{tpu_custom_call.1} parent=5 // pred_fallthru
        _
    $region6: #{tpu_custom_call.1} parent=1 // loop_footer
      %s17 = sadd.s32 1, %s13
    $region7: #{tpu_custom_call.1} parent=1 // loop_footer_branch
      %12 = sbr.rel target = $region3
    $region8: #{tpu_custom_call.1} parent=1 // loop_exit
      _
    %327 = vsyncpa [#allocation4], 1
    %s328 = scalar_lea.sflag [#allocation4], 1
    %329 = vsyncpa %s328, 1

</llo_original>
